<compile_context>
chip_gen: v6e
topology: v6e:2x2x1
jax: 0.10.0
libtpu: 0.0.40
codegen_flags: <defaults>
</compile_context>

<pallas_src>
import math
import functools

import jax
import jax.numpy as jnp
from jax import lax
from jax.experimental import pallas as pl
from jax.experimental.pallas import tpu as pltpu


_COMPUTE_DTYPE = jnp.bfloat16   # MXU operand dtype (accumulation is always f32)


@functools.lru_cache(maxsize=None)
def _vmem_limit_bytes():
    """Generation-aware VMEM budget (~3/4 of physical: ~96 MiB v5e/v6e, ~48 MiB v7x)."""
    try:
        cap = getattr(pltpu.get_tpu_info(), "vmem_capacity_bytes", None)
        if cap:
            return int(cap) * 3 // 4
    except Exception:
        pass
    return 48 * 1024 * 1024


def _pick_tile_exact(dim, candidates):
    """Largest candidate that exactly divides `dim`, else the full dim."""
    for c in candidates:
        if dim >= c and dim % c == 0:
            return c
    return dim


def _pick_tile_padded(dim, candidates):
    """Like _pick_tile_exact, but huge non-dividing dims get the largest candidate
    plus a pl.cdiv grid (Pallas masks the ragged tail block) instead of one giant block."""
    t = _pick_tile_exact(dim, candidates)
    if t == dim and dim > candidates[0]:
        return candidates[0]
    return t


# ------------------------- linear layers (y = x @ W + b) ---------------------

def _linear_resident_kernel(x_ref, w_ref, b_ref, o_ref):
    x = x_ref[...]
    w = w_ref[...]
    if x.dtype != w.dtype:
        x = x.astype(w.dtype)            # bf16 MXU operands
    acc = jnp.dot(x, w, preferred_element_type=jnp.float32)
    o_ref[...] = (acc + b_ref[...]).astype(o_ref.dtype)


def _linear_streamed_kernel(x_ref, w_ref, b_ref, o_ref, acc_ref):
    k = pl.program_id(2)

    @pl.when(k == 0)
    def _():
        acc_ref[...] = jnp.zeros_like(acc_ref)

    x = x_ref[...]
    w = w_ref[...]
    if x.dtype != w.dtype:
        x = x.astype(w.dtype)
    acc_ref[...] += jnp.dot(x, w, preferred_element_type=jnp.float32)

    @pl.when(k == pl.num_programs(2) - 1)
    def _():
        o_ref[...] = (acc_ref[...] + b_ref[...]).astype(o_ref.dtype)


def _linear_resident(x2d, w, b, out_dtype):
    """Weight-resident matmul: W is a single VMEM block reused for every M tile."""
    M, K = x2d.shape
    N = w.shape[1]
    tm = _pick_tile_padded(M, (1024, 512, 256, 128))
    cost = pl.CostEstimate(
        flops=2 * M * K * N, transcendentals=0,
        bytes_accessed=(M * K * x2d.dtype.itemsize + K * N * w.dtype.itemsize
                        + M * N * jnp.dtype(out_dtype).itemsize + 4 * N))
    return pl.pallas_call(
        _linear_resident_kernel,
        grid=(pl.cdiv(M, tm),),
        in_specs=[
            pl.BlockSpec((tm, K), lambda i: (i, 0)),
            pl.BlockSpec((K, N), lambda i: (0, 0)),      # same block every step -> resident
            pl.BlockSpec((1, N), lambda i: (0, 0)),
        ],
        out_specs=pl.BlockSpec((tm, N), lambda i: (i, 0)),
        out_shape=jax.ShapeDtypeStruct((M, N), out_dtype),
        compiler_params=pltpu.CompilerParams(
            dimension_semantics=("parallel",),
            vmem_limit_bytes=_vmem_limit_bytes()),
        cost_estimate=cost,
    )(x2d, w, jnp.reshape(b, (1, N)).astype(jnp.float32))


def _linear_streamed(x2d, w, b, out_dtype):
    """Fallback for weights too large to stay resident: k-streamed f32 accumulation."""
    M, K = x2d.shape
    N = w.shape[1]
    tm = _pick_tile_padded(M, (512, 256, 128))
    tn = _pick_tile_exact(N, (512, 256, 128))
    tk = _pick_tile_exact(K, (512, 256))
    cost = pl.CostEstimate(
        flops=2 * M * K * N, transcendentals=0,
        bytes_accessed=(M * K * x2d.dtype.itemsize + K * N * w.dtype.itemsize
                        + M * N * jnp.dtype(out_dtype).itemsize + 4 * N))
    return pl.pallas_call(
        _linear_streamed_kernel,
        grid=(pl.cdiv(M, tm), N // tn, K // tk),
        in_specs=[
            pl.BlockSpec((tm, tk), lambda i, j, k: (i, k)),
            pl.BlockSpec((tk, tn), lambda i, j, k: (k, j)),
            pl.BlockSpec((1, tn), lambda i, j, k: (0, j)),
        ],
        out_specs=pl.BlockSpec((tm, tn), lambda i, j, k: (i, j)),
        out_shape=jax.ShapeDtypeStruct((M, N), out_dtype),
        scratch_shapes=[pltpu.VMEM((tm, tn), jnp.float32)],
        compiler_params=pltpu.CompilerParams(
            dimension_semantics=("parallel", "parallel", "arbitrary"),
            vmem_limit_bytes=_vmem_limit_bytes()),
        cost_estimate=cost,
    )(x2d, w, jnp.reshape(b, (1, N)).astype(jnp.float32))


def linear(x2d, w, b, out_dtype=None):
    out_dtype = out_dtype or x2d.dtype
    K, N = w.shape
    if K * N * w.dtype.itemsize <= min(_vmem_limit_bytes() // 3, 24 * 1024 * 1024):
        return _linear_resident(x2d, w, b, out_dtype)
    return _linear_streamed(x2d, w, b, out_dtype)


# ----------------------- fused self-attention QKV projection -----------------

def _qkv_linear_kernel(x_ref, w_ref, b_ref, q_ref, k_ref, v_ref):
    x = x_ref[...]
    w = w_ref[...]
    if x.dtype != w.dtype:
        x = x.astype(w.dtype)
    acc = jnp.dot(x, w, preferred_element_type=jnp.float32) + b_ref[...]
    d = q_ref.shape[-1]
    q_ref[...] = acc[:, :d].astype(q_ref.dtype)
    k_ref[...] = acc[:, d:2 * d].astype(k_ref.dtype)
    v_ref[...] = acc[:, 2 * d:].astype(v_ref.dtype)


def qkv_linear(x2d, w_qkv, b_qkv, out_dtype):
    """Fused projection: one HBM read of x, resident (K, 3D) weight, three (M, D) outputs."""
    M, K = x2d.shape
    N3 = w_qkv.shape[1]
    D = N3 // 3
    if K * N3 * w_qkv.dtype.itemsize > min(_vmem_limit_bytes() // 3, 24 * 1024 * 1024):
        # TODO(synk): very large fused weights fall back to one streamed matmul + XLA split.
        qkv = _linear_streamed(x2d, w_qkv, b_qkv, out_dtype)
        return qkv[:, :D], qkv[:, D:2 * D], qkv[:, 2 * D:]

    tm = _pick_tile_padded(M, (1024, 512, 256, 128))
    out_sds = jax.ShapeDtypeStruct((M, D), out_dtype)
    out_spec = pl.BlockSpec((tm, D), lambda i: (i, 0))
    cost = pl.CostEstimate(
        flops=2 * M * K * N3, transcendentals=0,
        bytes_accessed=(M * K * x2d.dtype.itemsize + K * N3 * w_qkv.dtype.itemsize
                        + 3 * M * D * jnp.dtype(out_dtype).itemsize + 4 * N3))
    return pl.pallas_call(
        _qkv_linear_kernel,
        grid=(pl.cdiv(M, tm),),
        in_specs=[
            pl.BlockSpec((tm, K), lambda i: (i, 0)),
            pl.BlockSpec((K, N3), lambda i: (0, 0)),     # fused W_qkv resident in VMEM
            pl.BlockSpec((1, N3), lambda i: (0, 0)),
        ],
        out_specs=(out_spec, out_spec, out_spec),
        out_shape=(out_sds, out_sds, out_sds),
        compiler_params=pltpu.CompilerParams(
            dimension_semantics=("parallel",),
            vmem_limit_bytes=_vmem_limit_bytes()),
        cost_estimate=cost,
    )(x2d, w_qkv, jnp.reshape(b_qkv, (1, N3)).astype(jnp.float32))


# --------------------- flash-style scaled-dot-product attention --------------

def _heads_per_block(num_heads, dim_head):
    """Heads per grid block so the packed lane width is a multiple of 128 (or the full dim)."""
    if dim_head % 128 == 0:
        return 1
    if 128 % dim_head == 0:
        hb = min(num_heads, 128 // dim_head)
        if num_heads % hb == 0:
            return hb
    return num_heads


def _flash_attn_kernel(*refs, heads_per_blk, dim_head, has_mask, mask_heads_blk):
    if has_mask:
        q_ref, k_ref, v_ref, m_ref, o_ref, m_sc, l_sc, acc_sc = refs
    else:
        q_ref, k_ref, v_ref, o_ref, m_sc, l_sc, acc_sc = refs
        m_ref = None

    ki = pl.program_id(3)

    @pl.when(ki == 0)
    def _():
        m_sc[...] = jnp.full_like(m_sc, -jnp.inf)
        l_sc[...] = jnp.zeros_like(l_sc)
        acc_sc[...] = jnp.zeros_like(acc_sc)

    for hh in range(heads_per_blk):          # static unroll over heads in this block
        lo = hh * dim_head
        q_h = q_ref[0, :, lo:lo + dim_head]              # (tq,  dh) bf16, scale pre-folded
        k_h = k_ref[0, :, lo:lo + dim_head]              # (tkv, dh)
        v_h = v_ref[0, :, lo:lo + dim_head]              # (tkv, dh)

        # (tq, tkv) f32 scores; contract last dims -> no K transpose / relayout.
        s = lax.dot_general(q_h, k_h, (((1,), (1,)), ((), ())),
                            preferred_element_type=jnp.float32)
        if has_mask:
            mask_h = m_ref[0, hh if mask_heads_blk > 1 else 0]   # (tq, tkv) int8
            s = jnp.where(mask_h != 0, jnp.float32(-1000000.0), s)

        # online (flash) softmax update, stats kept in f32
        m_prev = m_sc[hh]
        m_new = jnp.maximum(m_prev, jnp.max(s, axis=-1, keepdims=True))
        alpha = jnp.exp(m_prev - m_new)
        p = jnp.exp(s - m_new)
        l_sc[hh] = alpha * l_sc[hh] + jnp.sum(p, axis=-1, keepdims=True)
        acc_sc[hh] = alpha * acc_sc[hh] + jnp.dot(
            p.astype(v_h.dtype), v_h, preferred_element_type=jnp.float32)
        m_sc[hh] = m_new

    @pl.when(ki == pl.num_programs(3) - 1)
    def _():
        for hh in range(heads_per_blk):
            lo = hh * dim_head
            l = l_sc[hh]
            inv = pl.reciprocal(l, approx=True)          # EUP slot
            inv = inv * (2.0 - l * inv)                  # one Newton step -> f32 accuracy
            # normalize the (tq, dh) accumulator, write straight into the output block
            o_ref[0, :, lo:lo + dim_head] = (acc_sc[hh] * inv).astype(o_ref.dtype)


def flash_attention(q, k, v, mask_i8, *, num_heads, dim_head):
    """q: (B, Lq, H*dh); k/v: (B, Lk, H*dh) packed layout; mask_i8: (Bm, Hm, Lq, Lk) or None."""
    B, Lq, D = q.shape
    Lk = k.shape[1]
    assert D == num_heads * dim_head

    hb = _heads_per_block(num_heads, dim_head)
    db = hb * dim_head
    tq = _pick_tile_exact(Lq, (256, 128))
    tkv = _pick_tile_exact(Lk, (512, 256, 128))
    # TODO(synk): sequence lengths not divisible by 128 fall back to a single full-length
    # block; pad/mask the ragged tail for production shapes.

    grid = (B, num_heads // hb, Lq // tq, Lk // tkv)

    q_spec = pl.BlockSpec((1, tq, db), lambda b, g, qi, ki: (b, qi, g))
    kv_spec = pl.BlockSpec((1, tkv, db), lambda b, g, qi, ki: (b, ki, g))

    in_specs = [q_spec, kv_spec, kv_spec]
    args = [q, k, v]

    has_mask = mask_i8 is not None
    mask_heads_blk = 1
    mask_bytes = 0
    if has_mask:
        Bm, Hm = int(mask_i8.shape[0]), int(mask_i8.shape[1])
        mask_heads_blk = hb if Hm > 1 else 1
        in_specs.append(pl.BlockSpec(
            (1, mask_heads_blk, tq, tkv),
            lambda b, g, qi, ki: ((b if Bm > 1 else 0), (g if Hm > 1 else 0), qi, ki)))
        args.append(mask_i8)
        mask_bytes = Bm * Hm * Lq * Lk           # int8

    kern = functools.partial(
        _flash_attn_kernel, heads_per_blk=hb, dim_head=dim_head,
        has_mask=has_mask, mask_heads_blk=mask_heads_blk)

    cost = pl.CostEstimate(
        flops=4 * B * num_heads * Lq * Lk * dim_head,
        transcendentals=B * num_heads * Lq * Lk,
        bytes_accessed=(2 * B * Lq * D + 2 * B * Lk * D) * q.dtype.itemsize + mask_bytes)

    return pl.pallas_call(
        kern,
        grid=grid,
        in_specs=in_specs,
        out_specs=q_spec,
        out_shape=jax.ShapeDtypeStruct((B, Lq, D), q.dtype),
        scratch_shapes=[
            pltpu.VMEM((hb, tq, 1), jnp.float32),            # running max
            pltpu.VMEM((hb, tq, 1), jnp.float32),            # running denominator
            pltpu.VMEM((hb, tq, dim_head), jnp.float32),     # running numerator
        ],
        compiler_params=pltpu.CompilerParams(
            dimension_semantics=("parallel", "parallel", "parallel", "arbitrary"),
            vmem_limit_bytes=_vmem_limit_bytes()),
        cost_estimate=cost,
    )(*args)


# ------------------------------ parameters -----------------------------------

def init_params(key, dim_input, num_heads, dim_attention):
    assert dim_input == num_heads * dim_attention
    ks = jax.random.split(key, 8)

    def lin(kw, kb, din, dout):
        bound = 1.0 / math.sqrt(din)     # nn.Linear default init range
        w = jax.random.uniform(kw, (din, dout), jnp.float32, -bound, bound)
        b = jax.random.uniform(kb, (dout,), jnp.float32, -bound, bound)
        return w, b

    d = num_heads * dim_attention
    return {
        "num_heads": num_heads,
        "dim_attention": dim_attention,
        "dim_input": dim_input,
        "w_q": lin(ks[0], ks[1], dim_input, d),
        "w_k": lin(ks[2], ks[3], dim_input, d),
        "w_v": lin(ks[4], ks[5], dim_input, d),
        "w_o": lin(ks[6], ks[7], d, dim_input),
    }


# ------------------------------ forward pass ----------------------------------

def mha_forward(params, Q, K, V, tgt_mask=None, compute_dtype=_COMPUTE_DTYPE):
    B, Lq, D = Q.shape
    assert D == params["dim_input"]
    H, dh = params["num_heads"], params["dim_attention"]
    Lk = K.shape[1]
    scale = 1.0 / math.sqrt(dh)          # folded into W_q / b_q -> no per-score multiply

    wq, bq = params["w_q"]
    wk, bk = params["w_k"]
    wv, bv = params["w_v"]

    if (Q is K) and (Q is V):
        # self-attention: fused QKV projection, activation read from HBM exactly once
        w_qkv = jnp.concatenate([wq * scale, wk, wv], axis=1).astype(compute_dtype)
        b_qkv = jnp.concatenate([bq * scale, bk, bv])
        q2, k2, v2 = qkv_linear(Q.reshape(B * Lq, D), w_qkv, b_qkv, compute_dtype)
    else:
        q2 = linear(Q.reshape(B * Lq, D), (wq * scale).astype(compute_dtype),
                    bq * scale, compute_dtype)
        k2 = linear(K.reshape(B * Lk, D), wk.astype(compute_dtype), bk, compute_dtype)
        v2 = linear(V.reshape(B * Lk, D), wv.astype(compute_dtype), bv, compute_dtype)

    q = q2.reshape(B, Lq, D)
    k = k2.reshape(B, Lk, D)
    v = v2.reshape(B, Lk, D)

    if tgt_mask is None:
        mask = None
    else:
        assert tgt_mask.ndim == 4
        Bm, Hm = int(tgt_mask.shape[0]), int(tgt_mask.shape[1])
        assert Bm in (1, B) and Hm in (1, H), "mask batch/head dims must be 1 or full"
        # keep the (possibly size-1) batch/head dims; only L dims broadcast; int8 stream
        mask = jnp.broadcast_to(tgt_mask, (Bm, Hm, Lq, Lk)).astype(jnp.int8)

    attn = flash_attention(q, k, v, mask, num_heads=H, dim_head=dh)

    w_o, b_o = params["w_o"]
    out = linear(attn.reshape(B * Lq, D), w_o.astype(compute_dtype), b_o, jnp.float32)
    return out.reshape(B, Lq, D)


# ------------------------------ pure-JAX reference ----------------------------

def mha_reference(params, Q, K, V, tgt_mask=None):
    B, Lq, D = Q.shape
    H, dh = params["num_heads"], params["dim_attention"]
    Lk = K.shape[1]

    def proj(x, wb, L):
        w, b = wb
        return (x @ w + b).reshape(B, L, H, dh).transpose(0, 2, 1, 3)

    q = proj(Q, params["w_q"], Lq)
    k = proj(K, params["w_k"], Lk)
    v = proj(V, params["w_v"], Lk)
    scores = jnp.einsum("bhqd,bhkd->bhqk", q, k) / math.sqrt(dh)
    if tgt_mask is not None:
        scores = jnp.where(jnp.broadcast_to(tgt_mask, scores.shape), -1000000.0, scores)
    probs = jax.nn.softmax(scores, axis=-1)
    attn = jnp.einsum("bhqk,bhkd->bhqd", probs, v)
    attn = attn.transpose(0, 2, 1, 3).reshape(B, Lq, H * dh)
    w_o, b_o = params["w_o"]
    return attn @ w_o + b_o


# ----------------------------------- main -------------------------------------

if __name__ == "__main__":
    B, L, H, dh = 2, 8, 4, 8
    D = H * dh  # 32

    key = jax.random.PRNGKey(0)
    kp, kq, kk, kv = jax.random.split(key, 4)
    params = init_params(kp, D, H, dh)

    Q = jax.random.normal(kq, (B, L, D), jnp.float32)
    K = jax.random.normal(kk, (B, L, D), jnp.float32)
    V = jax.random.normal(kv, (B, L, D), jnp.float32)

    # causal target mask (True == masked), dim == 4 as the module asserts
    tgt_mask = jnp.triu(jnp.ones((L, L), bool), k=1)[None, None]     # (1, 1, L, L)

    # bf16 MXU operands (f32 accumulation) -> compare against the f32 reference
    # with a correspondingly relaxed tolerance.
    ATOL = RTOL = 3e-2

    # 1) self-attention + causal mask (fused QKV projection path)
    X = Q
    out_self = jax.block_until_ready(mha_forward(params, X, X, X, tgt_mask))
    ref_self = mha_reference(params, X, X, X, tgt_mask)
    assert jnp.allclose(out_self, ref_self, atol=ATOL, rtol=RTOL)

    # 2) cross-attention, no mask (separate projections, mask-free kernel variant)
    out_cross = jax.block_until_ready(mha_forward(params, Q, K, V, None))
    ref_cross = mha_reference(params, Q, K, V, None)
    assert jnp.allclose(out_cross, ref_cross, atol=ATOL, rtol=RTOL)

    # 3) cross-attention with mask (mask stays (1, 1, L, L) int8 in HBM)
    out_cross_m = jax.block_until_ready(mha_forward(params, Q, K, V, tgt_mask))
    ref_cross_m = mha_reference(params, Q, K, V, tgt_mask)
    assert jnp.allclose(out_cross_m, ref_cross_m, atol=ATOL, rtol=RTOL)

    print("KERNEL_OK")
</pallas_src>

<mosaic_0001>
module attributes {stable_mosaic.version = 11 : i64} {
  func.func @_qkv_linear_kernel(%arg0: i32, %arg1: memref<16x32xf32, #tpu.memory_space<vmem>>, %arg2: memref<32x96xbf16, #tpu.memory_space<vmem>>, %arg3: memref<1x96xf32, #tpu.memory_space<vmem>>, %arg4: memref<16x32xbf16, #tpu.memory_space<vmem>>, %arg5: memref<16x32xbf16, #tpu.memory_space<vmem>>, %arg6: memref<16x32xbf16, #tpu.memory_space<vmem>>) attributes {dimension_semantics = [#tpu.dimension_semantics<parallel>], iteration_bounds = array<i64: 1>, scalar_prefetch = 0 : i64, scratch_operands = 0 : i64, tpu.core_type = #tpu.core_type<tc>, window_params = [{transform_indices = @transform_0, window_bounds = array<i64: 16, 32>}, {pipeline_mode = #tpu.pipeline_mode<synchronous>, transform_indices = @transform_1, window_bounds = array<i64: 32, 96>}, {pipeline_mode = #tpu.pipeline_mode<synchronous>, transform_indices = @transform_2, window_bounds = array<i64: 1, 96>}, {transform_indices = @transform_3, window_bounds = array<i64: 16, 32>}, {transform_indices = @transform_4, window_bounds = array<i64: 16, 32>}, {transform_indices = @transform_5, window_bounds = array<i64: 16, 32>}]} {
    %c0 = arith.constant 0 : index
    %c0_0 = arith.constant 0 : index
    %0 = vector.load %arg1[%c0, %c0_0] : memref<16x32xf32, #tpu.memory_space<vmem>>, vector<16x32xf32>
    %c0_1 = arith.constant 0 : index
    %c0_2 = arith.constant 0 : index
    %1 = vector.load %arg2[%c0_1, %c0_2] : memref<32x96xbf16, #tpu.memory_space<vmem>>, vector<32x96xbf16>
    %2 = arith.truncf %0 : vector<16x32xf32> to vector<16x32xbf16>
    %cst = arith.constant dense<0.000000e+00> : vector<16x96xf32>
    %3 = tpu.matmul %2, %1, %cst {dimension_numbers = #tpu.dot_dimension_numbers<[1], [0], [0], [1], [0, 0, 1, 1], [], []>} : vector<16x32xbf16>, vector<32x96xbf16>, vector<16x96xf32> -> vector<16x96xf32>
    %c0_3 = arith.constant 0 : index
    %c0_4 = arith.constant 0 : index
    %4 = vector.load %arg3[%c0_3, %c0_4] : memref<1x96xf32, #tpu.memory_space<vmem>>, vector<1x96xf32>
    %5 = vector.broadcast %4 : vector<1x96xf32> to vector<16x96xf32>
    %6 = arith.addf %3, %5 : vector<16x96xf32>
    %7 = vector.extract_strided_slice %6 {offsets = [0, 0], sizes = [16, 32], strides = [1, 1]} : vector<16x96xf32> to vector<16x32xf32>
    %8 = arith.truncf %7 : vector<16x32xf32> to vector<16x32xbf16>
    %c0_5 = arith.constant 0 : index
    %c0_6 = arith.constant 0 : index
    %9 = vector.load %arg4[%c0_5, %c0_6] : memref<16x32xbf16, #tpu.memory_space<vmem>>, vector<16x32xbf16>
    tpu.vector_store %arg4[%c0_5, %c0_6], %8 {strides = array<i32>} : memref<16x32xbf16, #tpu.memory_space<vmem>>, vector<16x32xbf16>,
    %10 = vector.extract_strided_slice %6 {offsets = [0, 32], sizes = [16, 32], strides = [1, 1]} : vector<16x96xf32> to vector<16x32xf32>
    %11 = arith.truncf %10 : vector<16x32xf32> to vector<16x32xbf16>
    %c0_7 = arith.constant 0 : index
    %c0_8 = arith.constant 0 : index
    %12 = vector.load %arg5[%c0_7, %c0_8] : memref<16x32xbf16, #tpu.memory_space<vmem>>, vector<16x32xbf16>
    tpu.vector_store %arg5[%c0_7, %c0_8], %11 {strides = array<i32>} : memref<16x32xbf16, #tpu.memory_space<vmem>>, vector<16x32xbf16>,
    %13 = vector.extract_strided_slice %6 {offsets = [0, 64], sizes = [16, 32], strides = [1, 1]} : vector<16x96xf32> to vector<16x32xf32>
    %14 = arith.truncf %13 : vector<16x32xf32> to vector<16x32xbf16>
    %c0_9 = arith.constant 0 : index
    %c0_10 = arith.constant 0 : index
    %15 = vector.load %arg6[%c0_9, %c0_10] : memref<16x32xbf16, #tpu.memory_space<vmem>>, vector<16x32xbf16>
    tpu.vector_store %arg6[%c0_9, %c0_10], %14 {strides = array<i32>} : memref<16x32xbf16, #tpu.memory_space<vmem>>, vector<16x32xbf16>,
    return
  }
  func.func @transform_0(%arg0: i32) -> (i32, i32) {
    %c0_i32 = arith.constant 0 : i32
    %c0_i32_0 = arith.constant 0 : i32
    return %arg0, %c0_i32 : i32, i32
  }
  func.func @transform_1(%arg0: i32) -> (i32, i32) {
    %c0_i32 = arith.constant 0 : i32
    %c0_i32_0 = arith.constant 0 : i32
    %c0_i32_1 = arith.constant 0 : i32
    return %c0_i32, %c0_i32_0 : i32, i32
  }
  func.func @transform_2(%arg0: i32) -> (i32, i32) {
    %c0_i32 = arith.constant 0 : i32
    %c0_i32_0 = arith.constant 0 : i32
    %c0_i32_1 = arith.constant 0 : i32
    return %c0_i32, %c0_i32_0 : i32, i32
  }
  func.func @transform_3(%arg0: i32) -> (i32, i32) {
    %c0_i32 = arith.constant 0 : i32
    %c0_i32_0 = arith.constant 0 : i32
    return %arg0, %c0_i32 : i32, i32
  }
  func.func @transform_4(%arg0: i32) -> (i32, i32) {
    %c0_i32 = arith.constant 0 : i32
    %c0_i32_0 = arith.constant 0 : i32
    return %arg0, %c0_i32 : i32, i32
  }
  func.func @transform_5(%arg0: i32) -> (i32, i32) {
    %c0_i32 = arith.constant 0 : i32
    %c0_i32_0 = arith.constant 0 : i32
    return %arg0, %c0_i32 : i32, i32
  }
}

</mosaic_0001>

<llo_original>
// kernel: tpu_custom_call.1
$region0: #{tpu_custom_call.1}
  #allocation0 [shape = 'u32[]', space=smem, size = 0x4, offset = 0x4, fixed_abs, tag = 'smem constant byte address 0x4 - core index']
  #allocation1 [shape = 'u32[144,128]{1,0:T(1,128)}', space=vmem, size = 0x12000, scoped, tag = 'internal scratch']
  %s0 = inlined_call_operand.hbm [shape: f32[16,32], index: 0, kind: input, shape index: {}]
  %s1 = inlined_call_operand.hbm [shape: bf16[32,96], index: 1, kind: input, shape index: {}]
  %s2 = inlined_call_operand.vmem [shape: f32[1,96], index: 2, kind: input, shape index: {}]
  %s3 = inlined_call_operand.hbm [shape: bf16[16,32], index: 3, kind: output, shape index: {0}]
  %s4 = inlined_call_operand.hbm [shape: bf16[16,32], index: 4, kind: output, shape index: {1}]
  %s5 = inlined_call_operand.hbm [shape: bf16[16,32], index: 5, kind: output, shape index: {2}]
  %6 = xla_tuple %s3, %s4, %s5
  %s7 = sld [smem:[#allocation0]]
  $region46: #{tpu_custom_call.1} parent=0
    _
  %s9 = ssub.s32 1, %s7
  %s10 = scalar_select 0, %s9, %s7
  $region1: #{tpu_custom_call.1} parent=0
    #allocation2 [shape = 'u8[8192]{0}', space=vmem, size = 0x2000, scoped, tag = 'input window, operand 0, single buffered']
    #allocation3 [shape = 's32[1]{0}', space=sflag, size = 0x4, scoped, tag = 'scoped memory for tpu_custom_call.1']
    #allocation4 [shape = 's32[1]{0}', space=sflag, size = 0x4, scoped, tag = 'scoped memory for tpu_custom_call.1']
    #allocation5 [shape = 'u8[8192]{0}', space=vmem, size = 0x2000, scoped, tag = 'input window, operand 1, single buffered']
    #allocation6 [shape = 's32[1]{0}', space=sflag, size = 0x4, scoped, tag = 'scoped memory for tpu_custom_call.1']
    #allocation7 [shape = 'u8[4096]{0}', space=vmem, size = 0x1000, scoped, tag = 'output window, operand 0, single buffered']
    #allocation8 [shape = 'u8[4096]{0}', space=vmem, size = 0x1000, scoped, tag = 'output window, operand 1, single buffered']
    #allocation9 [shape = 's32[1]{0}', space=sflag, size = 0x4, scoped, tag = 'scoped memory for tpu_custom_call.1']
    #allocation10 [shape = 'u8[4096]{0}', space=vmem, size = 0x1000, scoped, tag = 'output window, operand 2, single buffered']
    %11 = vsyncpa [#allocation3], 0
    %12 = vsyncpa [#allocation6], 0
    %13 = vsyncpa [#allocation4], 0
    %14 = vsyncpa [#allocation9], 0
    // Predicated region
    $region2: #{tpu_custom_call.1} parent=1 // pred_check
      _
    $region3: #{tpu_custom_call.1} parent=1 // pred_check_branch
      %16 = sbr.rel (0) target = $region5
    $region4: #{tpu_custom_call.1} parent=1 // pred_region
      %s18 = ssub.s32 256, 256
      %19 = vsyncadd [#allocation3], %s18
      %s20 = sshll.u32 [#allocation2], 4
      %s21 = int_to_ptr.vmem [resolvable:$true] %s20
      %26 = dma.hbm_to_vmem [thread:$0]  %s0, 256, %s21, [#allocation3], 128, 128, 8
    $region5: #{tpu_custom_call.1} parent=1 // pred_fallthru
      _
    // Predicated region
    $region6: #{tpu_custom_call.1} parent=1 // pred_check
      _
    $region7: #{tpu_custom_call.1} parent=1 // pred_check_branch
      %28 = sbr.rel (0) target = $region9
    $region8: #{tpu_custom_call.1} parent=1 // pred_region
      %s30 = ssub.s32 256, 256
      %31 = vsyncadd [#allocation6], %s30
      %s32 = sshll.u32 [#allocation5], 4
      %s33 = int_to_ptr.vmem [resolvable:$true] %s32
      %38 = dma.hbm_to_vmem [thread:$0]  %s1, 256, %s33, [#allocation6], 64, 64, 4
    $region9: #{tpu_custom_call.1} parent=1 // pred_fallthru
      _
    // Predicated region
    $region10: #{tpu_custom_call.1} parent=1 // pred_check
      _
    $region11: #{tpu_custom_call.1} parent=1 // pred_check_branch
      %40 = sbr.rel (0) target = $region13
    $region12: #{tpu_custom_call.1} parent=1 // pred_region
      _
    $region13: #{tpu_custom_call.1} parent=1 // pred_fallthru
      _
    // Predicated region
    $region14: #{tpu_custom_call.1} parent=1 // pred_check
      _
    $region15: #{tpu_custom_call.1} parent=1 // pred_check_branch
      %42 = sbr.rel (0) target = $region17
    $region16: #{tpu_custom_call.1} parent=1 // pred_region
      %43 = dma.done [#allocation3], 256
    $region17: #{tpu_custom_call.1} parent=1 // pred_fallthru
      _
    // Predicated region
    $region18: #{tpu_custom_call.1} parent=1 // pred_check
      _
    $region19: #{tpu_custom_call.1} parent=1 // pred_check_branch
      %45 = sbr.rel (0) target = $region21
    $region20: #{tpu_custom_call.1} parent=1 // pred_region
      %46 = dma.done [#allocation6], 256
    $region21: #{tpu_custom_call.1} parent=1 // pred_fallthru
      _
    %v48 = vld [vmem:[#allocation2] sm:$0xff]
    %v49 = vld [vmem:[#allocation2 + $0x8] sm:$0xff]
    %v50 = vld [vmem:[#allocation5] sm:$0xf]
    %v51 = vld [vmem:[#allocation5 + $0x4] sm:$0xf]
    %v52 = vld [vmem:[#allocation5 + $0x8] sm:$0xf]
    %v53 = vld [vmem:[#allocation5 + $0xc] sm:$0xf]
    %v54 = vpack.c.bf16 %v49, %v48
    %v55 = vld [vmem:[%s2] sm:$0x1]
    %v57 = vlaneseq
    %v58 = vshrl.u32 %v57, 7
    %v59 = vsub.s32 0, %v58
    %v60 = vrot.slane %v55, %v59
    %v66 = vunpack.c.l.b16 %v50
    %v67 = vunpack.c.l.b16 %v51
    %v68 = vunpack.c.l.b16 %v52
    %v69 = vunpack.c.l.b16 %v53
    %v70 = vpack.c.b16 %v67, %v66
    %v71 = vpack.c.b16 %v69, %v68
    %vm74 = vcmask 261120
    %v76 = vsel %vm74, %v54, 0
    %78 = vmatprep.subr.bf16.mxu0 0
    %79 = vmatpush1.bf16.msra.mxu0 0
    %80 = vmatprep.subr.bf16.mxu0 0
    %81 = vmatpush1.bf16.msra.mxu0 0
    %82 = vmatprep.subr.bf16.mxu0 0
    %83 = vmatpush1.bf16.msra.mxu0 0
    %84 = vmatprep.subr.bf16.mxu0 0
    %85 = vmatpush1.bf16.msra.mxu0 0
    %86 = vmatprep.subr.bf16.mxu0 0
    %87 = vmatpush1.bf16.msra.mxu0 0
    %88 = vmatprep.subr.bf16.mxu0 0
    %89 = vmatpush1.bf16.msra.mxu0 0
    %90 = vmatprep.subr.bf16.mxu0 0
    %91 = vmatpush1.bf16.msra.mxu0 %v71
    %92 = vmatprep.subr.bf16.mxu0 0
    %93 = vmatpush1.bf16.msra.mxu0 %v70
    %94 = vmatprep.subr.bf16.mxu0 0
    %95 = vmatpush2.bf16.msra.mxu0 0
    %96 = vmatprep.subr.bf16.mxu0 0
    %97 = vmatpush2.bf16.msra.mxu0 0
    %98 = vmatprep.subr.bf16.mxu0 0
    %99 = vmatpush2.bf16.msra.mxu0 0
    %100 = vmatprep.subr.bf16.mxu0 0
    %101 = vmatpush2.bf16.msra.mxu0 0
    %102 = vmatprep.subr.bf16.mxu0 0
    %103 = vmatpush2.bf16.msra.mxu0 0
    %104 = vmatprep.subr.bf16.mxu0 0
    %105 = vmatpush2.bf16.msra.mxu0 0
    %106 = vmatprep.subr.bf16.mxu0 0
    %107 = vmatpush2.bf16.msra.mxu0 0
    %108 = vmatprep.subr.bf16.mxu0 0
    %109 = vmatpush2.bf16.msra.mxu0 0
    %110 = vmatprep.mubr.bf16.mxu0 0
    %111 = vmatmul.mubr.bf16.gmra.mxu0 %v76
    %v112 = vpop.f32.mrf.mxu0
    %v113 = vadd.f32 %v60, %v112
    %v114 = vpop.f32.mrf.mxu0
    %v115 = vpop.f32.mrf.mxu0
    %v116 = vadd.f32 %v60, %v115
    %v117 = vpop.f32.mrf.mxu0
    %118 = vdwg.mxu0
    %v119 = vpack.c.bf16 %v116, %v113
    %v121 = vunpack.c.l.b16 %v119
    %v122 = vunpack.c.h.b16 %v119
    %v123 = vpack.c.b16 %v121, %v121
    %v124 = vpack.c.b16 %v122, %v122
    %vm127 = vcmask 257024
    %128 = vst.msk [vmem:[#allocation7] sm:$0xf] %vm127, %v123
    %129 = vst.msk [vmem:[#allocation7 + $0x4] sm:$0xf] %vm127, %v124
    %130 = vrot.lane.b32.xlu0 %v123, 96
    %v131 = vpop.permute.xlu0 %130
    %132 = vrot.lane.b32.xlu0 %v124, 96
    %v133 = vpop.permute.xlu0 %132
    %136 = vst.msk [vmem:[#allocation8] sm:$0xf] %vm127, %v131
    %137 = vst.msk [vmem:[#allocation8 + $0x4] sm:$0xf] %vm127, %v133
    %138 = vrot.lane.b32.xlu0 %v123, 64
    %v139 = vpop.permute.xlu0 %138
    %140 = vrot.lane.b32.xlu0 %v124, 64
    %v141 = vpop.permute.xlu0 %140
    %144 = vst.msk [vmem:[#allocation10] sm:$0xf] %vm127, %v139
    %145 = vst.msk [vmem:[#allocation10 + $0x4] sm:$0xf] %vm127, %v141
    // Predicated region
    $region22: #{tpu_custom_call.1} parent=1 // pred_check
      _
    $region23: #{tpu_custom_call.1} parent=1 // pred_check_branch
      %147 = sbr.rel (0) target = $region25
    $region24: #{tpu_custom_call.1} parent=1 // pred_region
      %s149 = ssub.s32 128, 128
      %150 = vsyncadd [#allocation4], %s149
      %s151 = sshll.u32 [#allocation7], 4
      %s152 = int_to_ptr.vmem [resolvable:$true] %s151
      %157 = dma.vmem_to_hbm [thread:$0]  %s152, 128, %s3, [#allocation4], 64, 64, 4
    $region25: #{tpu_custom_call.1} parent=1 // pred_fallthru
      _
    // Predicated region
    $region26: #{tpu_custom_call.1} parent=1 // pred_check
      _
    $region27: #{tpu_custom_call.1} parent=1 // pred_check_branch
      %159 = sbr.rel (0) target = $region29
    $region28: #{tpu_custom_call.1} parent=1 // pred_region
      %s161 = ssub.s32 128, 128
      %162 = vsyncadd [#allocation9], %s161
      %s163 = sshll.u32 [#allocation8], 4
      %s164 = int_to_ptr.vmem [resolvable:$true] %s163
      %169 = dma.vmem_to_hbm [thread:$0]  %s164, 128, %s4, [#allocation9], 64, 64, 4
    $region29: #{tpu_custom_call.1} parent=1 // pred_fallthru
      _
    // Predicated region
    $region30: #{tpu_custom_call.1} parent=1 // pred_check
      _
    $region31: #{tpu_custom_call.1} parent=1 // pred_check_branch
      %171 = sbr.rel (0) target = $region33
    $region32: #{tpu_custom_call.1} parent=1 // pred_region
      %s173 = ssub.s32 128, 128
      %174 = vsyncadd [#allocation9], %s173
      %s175 = sshll.u32 [#allocation10], 4
      %s176 = int_to_ptr.vmem [resolvable:$true] %s175
      %181 = dma.vmem_to_hbm [thread:$0]  %s176, 128, %s5, [#allocation9], 64, 64, 4
    $region33: #{tpu_custom_call.1} parent=1 // pred_fallthru
      _
    // Predicated region
    $region34: #{tpu_custom_call.1} parent=1 // pred_check
      _
    $region35: #{tpu_custom_call.1} parent=1 // pred_check_branch
      %183 = sbr.rel (0) target = $region37
    $region36: #{tpu_custom_call.1} parent=1 // pred_region
      %184 = dma.done [#allocation4], 128
    $region37: #{tpu_custom_call.1} parent=1 // pred_fallthru
      _
    // Predicated region
    $region38: #{tpu_custom_call.1} parent=1 // pred_check
      _
    $region39: #{tpu_custom_call.1} parent=1 // pred_check_branch
      %186 = sbr.rel (0) target = $region41
    $region40: #{tpu_custom_call.1} parent=1 // pred_region
      %187 = dma.done [#allocation9], 128
    $region41: #{tpu_custom_call.1} parent=1 // pred_fallthru
      _
    // Predicated region
    $region42: #{tpu_custom_call.1} parent=1 // pred_check
      _
    $region43: #{tpu_custom_call.1} parent=1 // pred_check_branch
      %189 = sbr.rel (0) target = $region45
    $region44: #{tpu_custom_call.1} parent=1 // pred_region
      %190 = dma.done [#allocation9], 128
    $region45: #{tpu_custom_call.1} parent=1 // pred_fallthru
      _
    %191 = vsyncpa [#allocation3], 1
    %192 = vsyncpa [#allocation6], 1
    %193 = vsyncpa [#allocation4], 1
    %194 = vsyncpa [#allocation9], 1

</llo_original>
